<compile_context>
chip_gen: v5e
topology: v5e:2x2
jax: 0.10.0
libtpu: 0.0.40
codegen_flags: <defaults>
</compile_context>

<pallas_src>
import functools

import jax
import jax.numpy as jnp
from jax.experimental import pallas as pl
from jax.experimental.pallas import tpu as pltpu


def _mlp_kernel(n_hidden, *refs):
    # refs = (x, w1, b1, [wh_stack, bh_stack], wf, bf, out)
    x_ref, w1_ref, b1_ref = refs[0], refs[1], refs[2]
    if n_hidden > 0:
        wh_ref, bh_ref, wf_ref, bf_ref, o_ref = refs[3:8]
    else:
        wf_ref, bf_ref, o_ref = refs[3:6]

    def mm(w, a):
        # MXU matmul with f32 accumulation.  Activations are cast to the
        # stored weight dtype: a no-op for f32 params, a single cheap VPU cast
        # per layer for bf16 params (weights themselves are never re-cast).
        return jnp.dot(w, a.astype(w.dtype), preferred_element_type=jnp.float32)

    # (features, batch) layout throughout: batch on the 128-lane axis, no
    # transposes anywhere, lane-dense output store.  Bias add / ReLU / sigmoid
    # stay in f32 vregs.
    h = jnp.maximum(mm(w1_ref[...], x_ref[...]) + b1_ref[...], 0.0)
    for j in range(n_hidden):                      # static unrolled loop
        h = jnp.maximum(mm(wh_ref[j], h) + bh_ref[j], 0.0)
    z = mm(wf_ref[...], h) + bf_ref[...]
    o_ref[...] = jax.nn.sigmoid(z).astype(o_ref.dtype)


def mlp_forward(x, params, *, batch_tile=4096):
    """x: (input_size, batch) — same layout the PyTorch forward receives.

    Returns (batch, output_size) float32, matching the PyTorch module.
    """
    (w1, b1), hidden, (wf, bf) = params
    n_hidden = 0 if hidden is None else int(hidden[0].shape[0])

    input_size, batch = x.shape
    nnodes = w1.shape[0]
    out_size = wf.shape[0]

    # ---- batch tiling -----------------------------------------------------
    # tb must be a multiple of 128 unless it covers the whole batch.  For
    # mid/large batches aim for >=2 grid steps (v7x megacore split) with a
    # large tile (default 4096) to amortize per-step cost and lengthen DMAs.
    if batch <= 256:
        tb = batch                                   # single full-extent block
    else:
        bt = 128 * pl.cdiv(batch_tile, 128)
        tb = min(bt, 128 * pl.cdiv(pl.cdiv(batch, 2), 128))
    grid = (pl.cdiv(batch, tb),)
    # No jnp.pad / post-slice: the last partial tile uses Pallas's masked
    # edge-block handling (verified below with batch % tb != 0).

    args = [x, w1, b1]
    in_specs = [
        pl.BlockSpec((input_size, tb), lambda i: (0, i)),       # streamed over batch
        pl.BlockSpec((nnodes, input_size), lambda i: (0, 0)),   # resident in VMEM
        pl.BlockSpec((nnodes, 1), lambda i: (0, 0)),
    ]
    if n_hidden > 0:
        wh_stack, bh_stack = hidden
        args += [wh_stack, bh_stack]
        in_specs += [
            pl.BlockSpec((n_hidden, nnodes, nnodes), lambda i: (0, 0, 0)),
            pl.BlockSpec((n_hidden, nnodes, 1), lambda i: (0, 0, 0)),
        ]
    args += [wf, bf]
    in_specs += [
        pl.BlockSpec((out_size, nnodes), lambda i: (0, 0)),
        pl.BlockSpec((out_size, 1), lambda i: (0, 0)),
    ]

    # ---- VMEM budget --------------------------------------------------------
    # x/out double-buffers + double-buffered resident params + a few live f32
    # (nnodes, tb) intermediates, 1.5x headroom, capped at v7x's 64 MiB.
    param_bytes = sum(int(a.size) * a.dtype.itemsize
                      for a in jax.tree_util.tree_leaves(params))
    est = (2 * input_size * tb * x.dtype.itemsize
           + 2 * out_size * tb * 4
           + 2 * param_bytes
           + (n_hidden + 3) * nnodes * tb * 4)
    vmem_limit = min(64 * 1024 * 1024, max(32 * 1024 * 1024, int(1.5 * est)))

    kernel = functools.partial(_mlp_kernel, n_hidden)
    out_fb = pl.pallas_call(
        kernel,
        out_shape=jax.ShapeDtypeStruct((out_size, batch), jnp.float32),
        grid=grid,
        in_specs=in_specs,
        out_specs=pl.BlockSpec((out_size, tb), lambda i: (0, i)),
        compiler_params=pltpu.CompilerParams(
            dimension_semantics=("parallel",),       # batch split across TCs (v7x)
            vmem_limit_bytes=vmem_limit),
    )(*args)

    if out_size == 1:
        # (1, batch) -> (batch, 1): metadata-only reshape, no HBM round-trip.
        return out_fb.reshape(batch, 1)
    return jnp.transpose(out_fb, (1, 0))


def init_mlp_params(key, input_size, output_size=1, n_hidden_layers=1, nnodes=32,
                    dtype=jnp.float32):
    """Deterministic init mirroring nn.Linear default uniform(-1/sqrt(in), 1/sqrt(in)).

    One-time layout/dtype choices live here (not per forward):
      weights: native (out_features, in_features), stored in `dtype`
      biases:  (out_features, 1) — broadcast over the lane (batch) axis
      hidden:  stacked ((n_hidden, nnodes, nnodes), (n_hidden, nnodes, 1)) or None
    """
    def linear(k, fan_in, fan_out):
        kw, kb = jax.random.split(k)
        bound = 1.0 / float(fan_in) ** 0.5
        w = jax.random.uniform(kw, (fan_out, fan_in), jnp.float32, -bound, bound)
        b = jax.random.uniform(kb, (fan_out, 1), jnp.float32, -bound, bound)
        return w.astype(dtype), b.astype(dtype)

    keys = jax.random.split(key, n_hidden_layers + 2)
    layer1 = linear(keys[0], input_size, nnodes)
    hidden_ws, hidden_bs = [], []
    for i in range(n_hidden_layers):
        if i + 2 == nnodes:   # same early-break condition as the PyTorch module
            break
        wh, bh = linear(keys[1 + i], nnodes, nnodes)
        hidden_ws.append(wh)
        hidden_bs.append(bh)
    hidden = (jnp.stack(hidden_ws), jnp.stack(hidden_bs)) if hidden_ws else None
    layerfin = linear(keys[-1], nnodes, output_size)
    return layer1, hidden, layerfin


def mlp_reference(x, params):
    """Pure-JAX (f32) reference of the PyTorch forward, for correctness checks."""
    f = lambda a: a.astype(jnp.float32)
    (w1, b1), hidden, (wf, bf) = params
    h = jnp.transpose(f(x), (1, 0))
    h = jnp.maximum(h @ f(w1).T + f(b1).T, 0.0)
    if hidden is not None:
        wh_stack, bh_stack = hidden
        for j in range(wh_stack.shape[0]):
            h = jnp.maximum(h @ f(wh_stack[j]).T + f(bh_stack[j]).T, 0.0)
    return jax.nn.sigmoid(h @ f(wf).T + f(bf).T)


if __name__ == "__main__":
    input_size = 16
    batch = 8
    nnodes = 32
    output_size = 1
    n_hidden_layers = 1

    key = jax.random.PRNGKey(0)
    kx, kp = jax.random.split(key)
    # The PyTorch forward takes x of shape (input_size, batch) and transposes it.
    x = jax.random.normal(kx, (input_size, batch), jnp.float32)
    params = init_mlp_params(kp, input_size, output_size, n_hidden_layers, nnodes)

    # f32 path, tiny batch (single full-extent block).
    out = jax.block_until_ready(mlp_forward(x, params))
    ref = mlp_reference(x, params)
    assert out.shape == (batch, output_size), out.shape
    assert jnp.allclose(out, ref, atol=1e-5, rtol=1e-5), "f32 mismatch vs reference"

    # bf16 stored end-to-end (x and params in bf16 -> HBM bytes halve);
    # f32 accumulation + f32 bias/ReLU/sigmoid inside the kernel.
    x_bf16 = x.astype(jnp.bfloat16)
    params_bf16 = init_mlp_params(kp, input_size, output_size, n_hidden_layers,
                                  nnodes, dtype=jnp.bfloat16)
    out_bf16 = jax.block_until_ready(mlp_forward(x_bf16, params_bf16))
    assert out_bf16.shape == (batch, output_size), out_bf16.shape
    assert jnp.allclose(out_bf16, ref, atol=5e-2), "bf16 mismatch vs reference"

    # Multi-step grid (>=2 steps) with a partial edge tile (batch % tb != 0),
    # exercising the no-pad / masked edge-block path.
    batch2 = 1000
    x2 = jax.random.normal(jax.random.PRNGKey(1), (input_size, batch2), jnp.float32)
    out2 = jax.block_until_ready(mlp_forward(x2, params))
    ref2 = mlp_reference(x2, params)
    assert out2.shape == (batch2, output_size), out2.shape
    assert jnp.allclose(out2, ref2, atol=1e-5, rtol=1e-5), "tiled mismatch vs reference"

    print("KERNEL_OK")
</pallas_src>

<mosaic_0001>
module attributes {stable_mosaic.version = 11 : i64} {
  func.func @_mlp_kernel(%arg0: i32, %arg1: memref<16x8xf32, #tpu.memory_space<vmem>>, %arg2: memref<32x16xf32, #tpu.memory_space<vmem>>, %arg3: memref<32x1xf32, #tpu.memory_space<vmem>>, %arg4: memref<1x32x32xf32, #tpu.memory_space<vmem>>, %arg5: memref<1x32x1xf32, #tpu.memory_space<vmem>>, %arg6: memref<1x32xf32, #tpu.memory_space<vmem>>, %arg7: memref<1x1xf32, #tpu.memory_space<vmem>>, %arg8: memref<1x8xf32, #tpu.memory_space<vmem>>) attributes {dimension_semantics = [#tpu.dimension_semantics<parallel>], iteration_bounds = array<i64: 1>, scalar_prefetch = 0 : i64, scratch_operands = 0 : i64, tpu.core_type = #tpu.core_type<tc>, window_params = [{transform_indices = @transform_0, window_bounds = array<i64: 16, 8>}, {pipeline_mode = #tpu.pipeline_mode<synchronous>, transform_indices = @transform_1, window_bounds = array<i64: 32, 16>}, {pipeline_mode = #tpu.pipeline_mode<synchronous>, transform_indices = @transform_2, window_bounds = array<i64: 32, 1>}, {pipeline_mode = #tpu.pipeline_mode<synchronous>, transform_indices = @transform_3, window_bounds = array<i64: 1, 32, 32>}, {pipeline_mode = #tpu.pipeline_mode<synchronous>, transform_indices = @transform_4, window_bounds = array<i64: 1, 32, 1>}, {pipeline_mode = #tpu.pipeline_mode<synchronous>, transform_indices = @transform_5, window_bounds = array<i64: 1, 32>}, {pipeline_mode = #tpu.pipeline_mode<synchronous>, transform_indices = @transform_6, window_bounds = array<i64: 1, 1>}, {transform_indices = @transform_7, window_bounds = array<i64: 1, 8>}]} {
    %c0 = arith.constant 0 : index
    %c0_0 = arith.constant 0 : index
    %0 = vector.load %arg2[%c0, %c0_0] : memref<32x16xf32, #tpu.memory_space<vmem>>, vector<32x16xf32>
    %c0_1 = arith.constant 0 : index
    %c0_2 = arith.constant 0 : index
    %1 = vector.load %arg1[%c0_1, %c0_2] : memref<16x8xf32, #tpu.memory_space<vmem>>, vector<16x8xf32>
    %cst = arith.constant dense<0.000000e+00> : vector<32x8xf32>
    %2 = tpu.matmul %0, %1, %cst {dimension_numbers = #tpu.dot_dimension_numbers<[1], [0], [0], [1], [0, 0, 1, 1], [], []>} : vector<32x16xf32>, vector<16x8xf32>, vector<32x8xf32> -> vector<32x8xf32>
    %c0_3 = arith.constant 0 : index
    %c0_4 = arith.constant 0 : index
    %3 = vector.load %arg3[%c0_3, %c0_4] : memref<32x1xf32, #tpu.memory_space<vmem>>, vector<32x1xf32>
    %4 = vector.broadcast %3 : vector<32x1xf32> to vector<32x8xf32>
    %5 = arith.addf %2, %4 : vector<32x8xf32>
    %cst_5 = arith.constant 0.000000e+00 : f32
    %6 = vector.broadcast %cst_5 : f32 to vector<32x8xf32>
    %7 = arith.maximumf %5, %6 : vector<32x8xf32>
    %c0_6 = arith.constant 0 : index
    %c0_7 = arith.constant 0 : index
    %c0_8 = arith.constant 0 : index
    %8 = vector.load %arg4[%c0_6, %c0_7, %c0_8] : memref<1x32x32xf32, #tpu.memory_space<vmem>>, vector<1x32x32xf32>
    %9 = vector.shape_cast %8 : vector<1x32x32xf32> to vector<32x32xf32>
    %cst_9 = arith.constant dense<0.000000e+00> : vector<32x8xf32>
    %10 = tpu.matmul %9, %7, %cst_9 {dimension_numbers = #tpu.dot_dimension_numbers<[1], [0], [0], [1], [0, 0, 1, 1], [], []>} : vector<32x32xf32>, vector<32x8xf32>, vector<32x8xf32> -> vector<32x8xf32>
    %c0_10 = arith.constant 0 : index
    %c0_11 = arith.constant 0 : index
    %c0_12 = arith.constant 0 : index
    %11 = vector.load %arg5[%c0_10, %c0_11, %c0_12] : memref<1x32x1xf32, #tpu.memory_space<vmem>>, vector<1x32x1xf32>
    %12 = vector.shape_cast %11 : vector<1x32x1xf32> to vector<32x1xf32>
    %13 = vector.broadcast %12 : vector<32x1xf32> to vector<32x8xf32>
    %14 = arith.addf %10, %13 : vector<32x8xf32>
    %cst_13 = arith.constant 0.000000e+00 : f32
    %15 = vector.broadcast %cst_13 : f32 to vector<32x8xf32>
    %16 = arith.maximumf %14, %15 : vector<32x8xf32>
    %c0_14 = arith.constant 0 : index
    %c0_15 = arith.constant 0 : index
    %17 = vector.load %arg6[%c0_14, %c0_15] : memref<1x32xf32, #tpu.memory_space<vmem>>, vector<1x32xf32>
    %cst_16 = arith.constant dense<0.000000e+00> : vector<1x8xf32>
    %18 = tpu.matmul %17, %16, %cst_16 {dimension_numbers = #tpu.dot_dimension_numbers<[1], [0], [0], [1], [0, 0, 1, 1], [], []>} : vector<1x32xf32>, vector<32x8xf32>, vector<1x8xf32> -> vector<1x8xf32>
    %c0_17 = arith.constant 0 : index
    %c0_18 = arith.constant 0 : index
    %19 = vector.load %arg7[%c0_17, %c0_18] : memref<1x1xf32, #tpu.memory_space<vmem>>, vector<1x1xf32>
    %20 = vector.broadcast %19 : vector<1x1xf32> to vector<1x8xf32>
    %21 = arith.addf %18, %20 : vector<1x8xf32>
    %22 = arith.negf %21 : vector<1x8xf32>
    %23 = math.exp %22 : vector<1x8xf32>
    %cst_19 = arith.constant 1.000000e+00 : f32
    %24 = vector.broadcast %cst_19 : f32 to vector<1x8xf32>
    %25 = arith.addf %24, %23 : vector<1x8xf32>
    %26 = arith.divf %24, %25 : vector<1x8xf32>
    %c0_20 = arith.constant 0 : index
    %c0_21 = arith.constant 0 : index
    %27 = vector.load %arg8[%c0_20, %c0_21] : memref<1x8xf32, #tpu.memory_space<vmem>>, vector<1x8xf32>
    tpu.vector_store %arg8[%c0_20, %c0_21], %26 {strides = array<i32>} : memref<1x8xf32, #tpu.memory_space<vmem>>, vector<1x8xf32>,
    return
  }
  func.func @transform_0(%arg0: i32) -> (i32, i32) {
    %c0_i32 = arith.constant 0 : i32
    %c0_i32_0 = arith.constant 0 : i32
    return %c0_i32, %arg0 : i32, i32
  }
  func.func @transform_1(%arg0: i32) -> (i32, i32) {
    %c0_i32 = arith.constant 0 : i32
    %c0_i32_0 = arith.constant 0 : i32
    %c0_i32_1 = arith.constant 0 : i32
    return %c0_i32, %c0_i32_0 : i32, i32
  }
  func.func @transform_2(%arg0: i32) -> (i32, i32) {
    %c0_i32 = arith.constant 0 : i32
    %c0_i32_0 = arith.constant 0 : i32
    %c0_i32_1 = arith.constant 0 : i32
    return %c0_i32, %c0_i32_0 : i32, i32
  }
  func.func @transform_3(%arg0: i32) -> (i32, i32, i32) {
    %c0_i32 = arith.constant 0 : i32
    %c0_i32_0 = arith.constant 0 : i32
    %c0_i32_1 = arith.constant 0 : i32
    %c0_i32_2 = arith.constant 0 : i32
    return %c0_i32, %c0_i32_0, %c0_i32_1 : i32, i32, i32
  }
  func.func @transform_4(%arg0: i32) -> (i32, i32, i32) {
    %c0_i32 = arith.constant 0 : i32
    %c0_i32_0 = arith.constant 0 : i32
    %c0_i32_1 = arith.constant 0 : i32
    %c0_i32_2 = arith.constant 0 : i32
    return %c0_i32, %c0_i32_0, %c0_i32_1 : i32, i32, i32
  }
  func.func @transform_5(%arg0: i32) -> (i32, i32) {
    %c0_i32 = arith.constant 0 : i32
    %c0_i32_0 = arith.constant 0 : i32
    %c0_i32_1 = arith.constant 0 : i32
    return %c0_i32, %c0_i32_0 : i32, i32
  }
  func.func @transform_6(%arg0: i32) -> (i32, i32) {
    %c0_i32 = arith.constant 0 : i32
    %c0_i32_0 = arith.constant 0 : i32
    %c0_i32_1 = arith.constant 0 : i32
    return %c0_i32, %c0_i32_0 : i32, i32
  }
  func.func @transform_7(%arg0: i32) -> (i32, i32) {
    %c0_i32 = arith.constant 0 : i32
    %c0_i32_0 = arith.constant 0 : i32
    return %c0_i32, %arg0 : i32, i32
  }
}

</mosaic_0001>

<llo_original>
// kernel: tpu_custom_call.1
$region0: #{tpu_custom_call.1}
  #allocation0 [shape = 'u32[]', space=smem, size = 0x4, offset = 0x4, fixed_abs, tag = 'smem constant byte address 0x4 - core index']
  #allocation1 [shape = 'u32[72,128]{1,0:T(1,128)}', space=vmem, size = 0x9000, scoped, tag = 'internal scratch']
  #allocation2 [shape = 'f32[1,1]{1,0:T(1,128)S(1)}', space=vmem, size = 0x200, scoped, tag = 'scoped memory for tpu_custom_call.1']
  %s0 = inlined_call_operand.vmem [shape: f32[16,8], index: 0, kind: input, shape index: {}]
  %s1 = inlined_call_operand.vmem [shape: f32[32,16], index: 1, kind: input, shape index: {}]
  %s2 = inlined_call_operand.vmem [shape: f32[32,1], index: 2, kind: input, shape index: {}]
  %s3 = inlined_call_operand.vmem [shape: f32[1,32,32], index: 3, kind: input, shape index: {}]
  %s4 = inlined_call_operand.vmem [shape: f32[1,32,1], index: 4, kind: input, shape index: {}]
  %s5 = inlined_call_operand.vmem [shape: f32[1,32], index: 5, kind: input, shape index: {}]
  %s6 = inlined_call_operand.<no memory space> [shape: f32[1,1], index: 6, kind: input, shape index: {}]
  %s7 = inlined_call_operand.hbm [shape: f32[1,8], index: 7, kind: output, shape index: {}]
  %s8 = sld [smem:[#allocation0]]
  $region38: #{tpu_custom_call.1} parent=0
    _
  %s10 = ssub.s32 1, %s8
  %s11 = scalar_select 0, %s10, %s8
  %v12 = vstv %s6
  %13 = vst [vmem:[#allocation2] sm:$0x1] %v12
  $region1: #{tpu_custom_call.1} parent=0
    #allocation3 [shape = 'u8[512]{0}', space=vmem, size = 0x400, scoped, tag = 'output window, operand 0, single buffered']
    #allocation4 [shape = 's32[1]{0}', space=sflag, size = 0x4, scoped, tag = 'scoped memory for tpu_custom_call.1']
    %14 = vsyncpa [#allocation4], 0
    // Predicated region
    $region2: #{tpu_custom_call.1} parent=1 // pred_check
      _
    $region3: #{tpu_custom_call.1} parent=1 // pred_check_branch
      %16 = sbr.rel (0) target = $region5
    $region4: #{tpu_custom_call.1} parent=1 // pred_region
      _
    $region5: #{tpu_custom_call.1} parent=1 // pred_fallthru
      _
    // Predicated region
    $region6: #{tpu_custom_call.1} parent=1 // pred_check
      _
    $region7: #{tpu_custom_call.1} parent=1 // pred_check_branch
      %18 = sbr.rel (0) target = $region9
    $region8: #{tpu_custom_call.1} parent=1 // pred_region
      _
    $region9: #{tpu_custom_call.1} parent=1 // pred_fallthru
      _
    // Predicated region
    $region10: #{tpu_custom_call.1} parent=1 // pred_check
      _
    $region11: #{tpu_custom_call.1} parent=1 // pred_check_branch
      %20 = sbr.rel (0) target = $region13
    $region12: #{tpu_custom_call.1} parent=1 // pred_region
      _
    $region13: #{tpu_custom_call.1} parent=1 // pred_fallthru
      _
    // Predicated region
    $region14: #{tpu_custom_call.1} parent=1 // pred_check
      _
    $region15: #{tpu_custom_call.1} parent=1 // pred_check_branch
      %22 = sbr.rel (0) target = $region17
    $region16: #{tpu_custom_call.1} parent=1 // pred_region
      _
    $region17: #{tpu_custom_call.1} parent=1 // pred_fallthru
      _
    // Predicated region
    $region18: #{tpu_custom_call.1} parent=1 // pred_check
      _
    $region19: #{tpu_custom_call.1} parent=1 // pred_check_branch
      %24 = sbr.rel (0) target = $region21
    $region20: #{tpu_custom_call.1} parent=1 // pred_region
      _
    $region21: #{tpu_custom_call.1} parent=1 // pred_fallthru
      _
    // Predicated region
    $region22: #{tpu_custom_call.1} parent=1 // pred_check
      _
    $region23: #{tpu_custom_call.1} parent=1 // pred_check_branch
      %26 = sbr.rel (0) target = $region25
    $region24: #{tpu_custom_call.1} parent=1 // pred_region
      _
    $region25: #{tpu_custom_call.1} parent=1 // pred_fallthru
      _
    // Predicated region
    $region26: #{tpu_custom_call.1} parent=1 // pred_check
      _
    $region27: #{tpu_custom_call.1} parent=1 // pred_check_branch
      %28 = sbr.rel (0) target = $region29
    $region28: #{tpu_custom_call.1} parent=1 // pred_region
      _
    $region29: #{tpu_custom_call.1} parent=1 // pred_fallthru
      _
    %v29 = vld [vmem:[%s1] sm:$0xff]
    %v30 = vld [vmem:[%s1 + $0x8] sm:$0xff]
    %v31 = vld [vmem:[%s1 + $0x10] sm:$0xff]
    %v32 = vld [vmem:[%s1 + $0x18] sm:$0xff]
    %v33 = vld [vmem:[%s0] sm:$0xff]
    %v34 = vld [vmem:[%s0 + $0x8] sm:$0xff]
    %v35 = vld [vmem:[%s2] sm:$0xff]
    %v36 = vld [vmem:[%s2 + $0x8] sm:$0xff]
    %v37 = vld [vmem:[%s2 + $0x10] sm:$0xff]
    %v38 = vld [vmem:[%s2 + $0x18] sm:$0xff]
    %40 = vset.pattern.permute.xlu0 0
    %41 = vperm.xlu0 %40, %v35
    %v42 = vpop.permute.xlu0 %41
    %45 = vset.pattern.permute.xlu0 0
    %46 = vperm.xlu0 %45, %v36
    %v47 = vpop.permute.xlu0 %46
    %50 = vset.pattern.permute.xlu0 0
    %51 = vperm.xlu0 %50, %v37
    %v52 = vpop.permute.xlu0 %51
    %55 = vset.pattern.permute.xlu0 0
    %56 = vperm.xlu0 %55, %v38
    %v57 = vpop.permute.xlu0 %56
    %vm59 = vcmask 130048
    %v61 = vsel %vm59, %v29, 0
    %v64 = vsel %vm59, %v30, 0
    %v67 = vsel %vm59, %v31, 0
    %v70 = vsel %vm59, %v32, 0
    %72 = vmatpush.msra.mxu0 0.0
    %73 = vmatpush.msra.mxu0 0.0
    %74 = vmatpush.msra.mxu0 0.0
    %75 = vmatpush.msra.mxu0 0.0
    %76 = vmatpush.msra.mxu0 0.0
    %77 = vmatpush.msra.mxu0 0.0
    %78 = vmatpush.msra.mxu0 0.0
    %79 = vmatpush.msra.mxu0 0.0
    %80 = vmatpush.msra.mxu0 0.0
    %81 = vmatpush.msra.mxu0 0.0
    %82 = vmatpush.msra.mxu0 0.0
    %83 = vmatpush.msra.mxu0 0.0
    %84 = vmatpush.msra.mxu0 0.0
    %85 = vmatpush.msra.mxu0 0.0
    %86 = vmatpush.msra.mxu0 %v34
    %87 = vmatpush.msra.mxu0 %v33
    %88 = vmatmul.f32.gmra.mxu0 %v61
    %v89 = vpop.f32.mrf.mxu0
    %v90 = vadd.f32 %v42, %v89
    %91 = vmatmul.f32.gmra.mxu0 %v64
    %v92 = vpop.f32.mrf.mxu0
    %v93 = vadd.f32 %v47, %v92
    %94 = vmatmul.f32.gmra.mxu0 %v67
    %v95 = vpop.f32.mrf.mxu0
    %v96 = vadd.f32 %v52, %v95
    %97 = vmatmul.f32.gmra.mxu0 %v70
    %v98 = vpop.f32.mrf.mxu0
    %v99 = vadd.f32 %v57, %v98
    %100 = vdwg.mxu0
    %v101 = vmax.f32 %v90, 0.0
    %v102 = vmax.f32 %v93, 0.0
    %v103 = vmax.f32 %v96, 0.0
    %v104 = vmax.f32 %v99, 0.0
    %v105 = vld [vmem:[%s3] sm:$0xff]
    %v106 = vld [vmem:[%s3 + $0x8] sm:$0xff]
    %v107 = vld [vmem:[%s3 + $0x10] sm:$0xff]
    %v108 = vld [vmem:[%s3 + $0x18] sm:$0xff]
    %v109 = vld [vmem:[%s4] sm:$0xff]
    %v110 = vld [vmem:[%s4 + $0x8] sm:$0xff]
    %v111 = vld [vmem:[%s4 + $0x10] sm:$0xff]
    %v112 = vld [vmem:[%s4 + $0x18] sm:$0xff]
    %114 = vset.pattern.permute.xlu0 0
    %115 = vperm.xlu0 %114, %v109
    %v116 = vpop.permute.xlu0 %115
    %119 = vset.pattern.permute.xlu0 0
    %120 = vperm.xlu0 %119, %v110
    %v121 = vpop.permute.xlu0 %120
    %124 = vset.pattern.permute.xlu0 0
    %125 = vperm.xlu0 %124, %v111
    %v126 = vpop.permute.xlu0 %125
    %129 = vset.pattern.permute.xlu0 0
    %130 = vperm.xlu0 %129, %v112
    %v131 = vpop.permute.xlu0 %130
    %vm133 = vcmask 261120
    %v135 = vsel %vm133, %v105, 0
    %v138 = vsel %vm133, %v106, 0
    %v141 = vsel %vm133, %v107, 0
    %v144 = vsel %vm133, %v108, 0
    %146 = vmatpush.msra.mxu0 0.0
    %147 = vmatpush.msra.mxu0 0.0
    %148 = vmatpush.msra.mxu0 0.0
    %149 = vmatpush.msra.mxu0 0.0
    %150 = vmatpush.msra.mxu0 0.0
    %151 = vmatpush.msra.mxu0 0.0
    %152 = vmatpush.msra.mxu0 0.0
    %153 = vmatpush.msra.mxu0 0.0
    %154 = vmatpush.msra.mxu0 0.0
    %155 = vmatpush.msra.mxu0 0.0
    %156 = vmatpush.msra.mxu0 0.0
    %157 = vmatpush.msra.mxu0 0.0
    %158 = vmatpush.msra.mxu0 %v104
    %159 = vmatpush.msra.mxu0 %v103
    %160 = vmatpush.msra.mxu0 %v102
    %161 = vmatpush.msra.mxu0 %v101
    %162 = vmatmul.f32.gmra.mxu0 %v135
    %v163 = vpop.f32.mrf.mxu0
    %v164 = vadd.f32 %v116, %v163
    %165 = vmatmul.f32.gmra.mxu0 %v138
    %v166 = vpop.f32.mrf.mxu0
    %v167 = vadd.f32 %v121, %v166
    %168 = vmatmul.f32.gmra.mxu0 %v141
    %v169 = vpop.f32.mrf.mxu0
    %v170 = vadd.f32 %v126, %v169
    %171 = vmatmul.f32.gmra.mxu0 %v144
    %v172 = vpop.f32.mrf.mxu0
    %v173 = vadd.f32 %v131, %v172
    %174 = vdwg.mxu0
    %v175 = vmax.f32 %v164, 0.0
    %v176 = vmax.f32 %v167, 0.0
    %v177 = vmax.f32 %v170, 0.0
    %v178 = vmax.f32 %v173, 0.0
    %v179 = vld [vmem:[%s5] sm:$0x1]
    %v180 = vld [vmem:[#allocation2] sm:$0x1]
    %182 = vset.pattern.permute.xlu0 0
    %183 = vperm.xlu0 %182, %v180
    %v184 = vpop.permute.xlu0 %183
    %v186 = vperm.slane %v184, 0
    %v188 = vsel %vm133, %v179, 0
    %190 = vmatpush.msra.mxu0 0.0
    %191 = vmatpush.msra.mxu0 0.0
    %192 = vmatpush.msra.mxu0 0.0
    %193 = vmatpush.msra.mxu0 0.0
    %194 = vmatpush.msra.mxu0 0.0
    %195 = vmatpush.msra.mxu0 0.0
    %196 = vmatpush.msra.mxu0 0.0
    %197 = vmatpush.msra.mxu0 0.0
    %198 = vmatpush.msra.mxu0 0.0
    %199 = vmatpush.msra.mxu0 0.0
    %200 = vmatpush.msra.mxu0 0.0
    %201 = vmatpush.msra.mxu0 0.0
    %202 = vmatpush.msra.mxu0 %v178
    %203 = vmatpush.msra.mxu0 %v177
    %204 = vmatpush.msra.mxu0 %v176
    %205 = vmatpush.msra.mxu0 %v175
    %206 = vmatmul.f32.gmra.mxu0 %v188
    %v207 = vpop.f32.mrf.mxu0
    %v208 = vadd.f32 %v186, %v207
    %209 = vdwg.mxu0
    %v210 = vxor.u32 %v208, 2147483648
    %v211 = vmul.f32 %v210, 1.442695
    %v212 = vpow.pop %v211
    %v213 = vadd.f32 %v212, 1.0
    %v214 = vrcp.pop %v213
    %v215 = vmul.f32 %v213, %v214
    %v216 = vsub.f32 1.0, %v215
    %v217 = vmul.f32 %v214, %v216
    %v218 = vadd.f32 %v214, %v217
    %vm219 = vweird.f32 %v213
    %vm220 = vweird.f32 %v214
    %vm221 = vmor %vm219, %vm220
    %v222 = vsel %vm221, %v214, %v218
    %v223 = vand.u32 2147483647, %v213
    %vm224 = vcmp.eq.f32.partialorder %v223, 8.507059e+37
    %v225 = vand.u32 %v213, 2147483648
    %v226 = vor.u32 1.1754944e-38, %v225
    %v227 = vsel %vm224, %v226, %v222
    %v228 = vmul.f32 1.0, %v227
    %vm229 = vcmask 57344
    %230 = vst.msk [vmem:[#allocation3] sm:$0x1] %vm229, %v228
    // Predicated region
    $region30: #{tpu_custom_call.1} parent=1 // pred_check
      _
    $region31: #{tpu_custom_call.1} parent=1 // pred_check_branch
      %232 = sbr.rel (0) target = $region33
    $region32: #{tpu_custom_call.1} parent=1 // pred_region
      %234 = vsyncadd [#allocation4], 0
      %s236 = sshll.u32 [#allocation3], 4
      %s237 = int_to_ptr.vmem [resolvable:$true] %s236
      %s238 = sshll.u32 %s7, 4
      %s239 = int_to_ptr.hbm [resolvable:$true] %s238
      %241 = dma.vmem_to_hbm [thread:$0]  %s237, 16, %s239, [#allocation4]
    $region33: #{tpu_custom_call.1} parent=1 // pred_fallthru
      _
    // Predicated region
    $region34: #{tpu_custom_call.1} parent=1 // pred_check
      _
    $region35: #{tpu_custom_call.1} parent=1 // pred_check_branch
      %243 = sbr.rel (0) target = $region37
    $region36: #{tpu_custom_call.1} parent=1 // pred_region
      %245 = dma.done [#allocation4], 16
    $region37: #{tpu_custom_call.1} parent=1 // pred_fallthru
      _
    %246 = vsyncpa [#allocation4], 1

</llo_original>
